<compile_context>
chip_gen: v7x
topology: tpu7x:2x2x1
jax: 0.10.0
libtpu: 0.0.40
codegen_flags: <defaults>
</compile_context>

<pallas_src>
import functools
import numpy as np
import jax
import jax.numpy as jnp
from jax import lax
from jax.experimental import pallas as pl
from jax.experimental.pallas import tpu as pltpu

LEARNED_DIM = 32          # learned_embedding_dim
PRETRAINED_DIM = 64       # dim of the fixed (from_pretrained) vectors

DATA_TYPES = ["protein", "molecule", "text"]
EMBEDDING_DATA_TYPES = ["protein", "molecule"]   # have pretrained .vec
REACTION, COMPLEX = "reaction", "complex"


# ----------------------------------------------------------------------------
# Pallas kernel: out[r, :] = table[idx[r], :]   (indices already offset-rebased)
# Vectorized as an exact one-hot matmul on the MXU; all tiles lane-dense.
# ----------------------------------------------------------------------------
def _gather_kernel(idx_ref, table_ref, out_ref):
    tile_n = out_ref.shape[0]
    v_pad = table_ref.shape[0]
    idx = idx_ref[...]                                             # (tile_n, 1) int32
    iota = lax.broadcasted_iota(jnp.int32, (tile_n, v_pad), 1)     # (tile_n, v_pad)
    one_hot = (iota == idx).astype(table_ref.dtype)                # exact 0/1 rows
    # HIGHEST precision -> bf16x3 decomposition reproduces the f32 rows exactly
    # (one-hot selects a single term; accumulation is in f32).
    out_ref[...] = jnp.dot(
        one_hot, table_ref[...],
        preferred_element_type=jnp.float32,
        precision=lax.Precision.HIGHEST,
    ).astype(out_ref.dtype)


@functools.partial(jax.jit, static_argnames=())
def embedding_gather(idx, table):
    """idx: (N,) int32 (already offset-subtracted), table: (V, D) f32 -> (N, D) f32."""
    n = int(idx.shape[0])
    v, d = int(table.shape[0]), int(table.shape[1])

    # Lane-dense / sublane-aligned padding (slice back after the call).
    d_pad = ((d + 127) // 128) * 128
    v_pad = ((v + 7) // 8) * 8
    tile_n = 128 if n >= 128 else ((n + 7) // 8) * 8
    n_pad = ((n + tile_n - 1) // tile_n) * tile_n

    idx2 = jnp.zeros((n_pad, 1), jnp.int32).at[:n, 0].set(idx.astype(jnp.int32))
    table_p = jnp.zeros((v_pad, d_pad), table.dtype).at[:v, :d].set(table)

    out = pl.pallas_call(
        _gather_kernel,
        out_shape=jax.ShapeDtypeStruct((n_pad, d_pad), table.dtype),
        grid_spec=pltpu.PrefetchScalarGridSpec(
            num_scalar_prefetch=0,
            grid=(n_pad // tile_n,),
            in_specs=[
                pl.BlockSpec((tile_n, 1), lambda i: (i, 0)),       # rebased indices
                pl.BlockSpec((v_pad, d_pad), lambda i: (0, 0)),    # tiny table, resident
            ],
            out_specs=pl.BlockSpec((tile_n, d_pad), lambda i: (i, 0)),
        ),
        compiler_params=pltpu.CompilerParams(
            dimension_semantics=("parallel",)),
    )(idx2, table_p)
    return out[:n, :d]


# ----------------------------------------------------------------------------
# Synthetic NodesIndexManager (deterministic, in-script)
# ----------------------------------------------------------------------------
class SyntheticNodesIndexManager:
    def __init__(self):
        self.dtype_to_first_index = {}
        self.dtype_to_last_index = {}
        self.index_to_type = []
        layout = [(REACTION, 1), (COMPLEX, 1),
                  ("protein", 16), ("molecule", 12), ("text", 10)]
        i = 0
        for name, n in layout:
            self.dtype_to_first_index[name] = i
            self.dtype_to_last_index[name] = i + n
            self.index_to_type += [name] * n
            i += n
        # deterministic "pretrained" vectors for embedding data types
        rng = np.random.RandomState(0)
        self.pretrained_vectors = {
            "protein": rng.randn(16, PRETRAINED_DIM).astype(np.float32),
            "molecule": rng.randn(12, PRETRAINED_DIM).astype(np.float32),
        }


def build_embeddings(nim, learned_dim):
    """Mirrors PartialFixedEmbedding.__init__: dict of embedding tables."""
    keys = jax.random.split(jax.random.PRNGKey(0), 4)
    tables = {
        REACTION: jax.random.normal(keys[0], (1, learned_dim), jnp.float32),
        COMPLEX: jax.random.normal(keys[1], (1, learned_dim), jnp.float32),
    }
    ki = 2
    for dtype in DATA_TYPES:
        if dtype in EMBEDDING_DATA_TYPES:
            # frozen pretrained table (train_all_emd only toggles grads; fwd identical)
            tables[dtype] = jnp.asarray(nim.pretrained_vectors[dtype])
        else:
            n = nim.dtype_to_last_index[dtype] - nim.dtype_to_first_index[dtype]
            tables[dtype] = jax.random.normal(keys[ki], (n, learned_dim), jnp.float32)
            ki += 1
    return tables


def partial_fixed_embedding_forward(tables, nim, x):
    """x: (N, 1) int32 node indices -> (N, D_dtype) float32 embeddings."""
    x = jnp.asarray(x)
    idx = x[:, 0]                                   # x.squeeze(1)
    # Host-side dtype dispatch — inherent to the module (x[0].item()): the output
    # dim depends on the dtype, so this single-scalar sync cannot move on-device.
    dtype = nim.index_to_type[int(jax.device_get(idx[0]))]
    table = tables[dtype]
    if dtype in (REACTION, COMPLEX):
        # zeros_like(x) lookup into a 1-row table == row-0 broadcast; skip Pallas.
        return jnp.broadcast_to(table[0], (idx.shape[0], table.shape[1]))
    offset = nim.dtype_to_first_index[dtype]        # x - first_index[dtype]
    return embedding_gather(idx.astype(jnp.int32) - jnp.int32(offset), table)


# ----------------------------------------------------------------------------
if __name__ == "__main__":
    nim = SyntheticNodesIndexManager()
    tables = build_embeddings(nim, LEARNED_DIM)
    key = jax.random.PRNGKey(0)

    # ---- branch 1: an embedding data type ("protein", frozen pretrained vectors)
    lo = nim.dtype_to_first_index["protein"]
    hi = nim.dtype_to_last_index["protein"]
    x_protein = jax.random.randint(key, (8, 1), lo, hi, dtype=jnp.int32)
    out_p = jax.block_until_ready(
        partial_fixed_embedding_forward(tables, nim, x_protein))
    ref_p = np.asarray(tables["protein"])[np.asarray(x_protein).squeeze(1) - lo]
    assert out_p.shape == (8, PRETRAINED_DIM)
    assert np.allclose(np.asarray(out_p), ref_p), "protein gather mismatch"

    # ---- branch 2: reaction/complex (single learned row broadcast to all indices)
    x_reaction = jnp.zeros((8, 1), dtype=jnp.int32)
    out_r = jax.block_until_ready(
        partial_fixed_embedding_forward(tables, nim, x_reaction))
    ref_r = np.broadcast_to(np.asarray(tables[REACTION])[0], (8, LEARNED_DIM))
    assert out_r.shape == (8, LEARNED_DIM)
    assert np.allclose(np.asarray(out_r), ref_r), "reaction lookup mismatch"

    # ---- branch 3: a learned (non-pretrained) data type ("text")
    lo_t = nim.dtype_to_first_index["text"]
    hi_t = nim.dtype_to_last_index["text"]
    x_text = jax.random.randint(jax.random.PRNGKey(1), (8, 1), lo_t, hi_t,
                                dtype=jnp.int32)
    out_t = jax.block_until_ready(
        partial_fixed_embedding_forward(tables, nim, x_text))
    ref_t = np.asarray(tables["text"])[np.asarray(x_text).squeeze(1) - lo_t]
    assert np.allclose(np.asarray(out_t), ref_t), "text gather mismatch"

    # ---- larger batch to exercise the N-grid path (tile_n=128, 2 tiles)
    x_big = jax.random.randint(jax.random.PRNGKey(2), (200, 1), lo, hi,
                               dtype=jnp.int32)
    out_b = jax.block_until_ready(
        partial_fixed_embedding_forward(tables, nim, x_big))
    ref_b = np.asarray(tables["protein"])[np.asarray(x_big).squeeze(1) - lo]
    assert np.allclose(np.asarray(out_b), ref_b), "large-batch gather mismatch"

    print("KERNEL_OK")
</pallas_src>

<mosaic_0001>
module attributes {stable_mosaic.version = 11 : i64} {
  func.func @_gather_kernel(%arg0: i32, %arg1: memref<8x1xi32, #tpu.memory_space<vmem>>, %arg2: memref<16x128xf32, #tpu.memory_space<vmem>>, %arg3: memref<8x128xf32, #tpu.memory_space<vmem>>) attributes {dimension_semantics = [#tpu.dimension_semantics<parallel>], iteration_bounds = array<i64: 1>, scalar_prefetch = 0 : i64, scratch_operands = 0 : i64, tpu.core_type = #tpu.core_type<tc>, window_params = [{transform_indices = @transform_0, window_bounds = array<i64: 8, 1>}, {pipeline_mode = #tpu.pipeline_mode<synchronous>, transform_indices = @transform_1, window_bounds = array<i64: 16, 128>}, {transform_indices = @transform_2, window_bounds = array<i64: 8, 128>}]} {
    %c0 = arith.constant 0 : index
    %c0_0 = arith.constant 0 : index
    %0 = vector.load %arg1[%c0, %c0_0] : memref<8x1xi32, #tpu.memory_space<vmem>>, vector<8x1xi32>
    %1 = tpu.iota {dimensions = array<i32: 1>} : vector<8x16xi32>
    %2 = vector.broadcast %0 : vector<8x1xi32> to vector<8x16xi32>
    %3 = arith.cmpi eq, %1, %2 : vector<8x16xi32>
    %4 = arith.extui %3 : vector<8x16xi1> to vector<8x16xi32>
    %5 = arith.sitofp %4 : vector<8x16xi32> to vector<8x16xf32>
    %c0_1 = arith.constant 0 : index
    %c0_2 = arith.constant 0 : index
    %6 = vector.load %arg2[%c0_1, %c0_2] : memref<16x128xf32, #tpu.memory_space<vmem>>, vector<16x128xf32>
    %cst = arith.constant dense<0.000000e+00> : vector<8x128xf32>
    %7 = tpu.matmul %5, %6, %cst {dimension_numbers = #tpu.dot_dimension_numbers<[1], [0], [0], [1], [0, 0, 1, 1], [], []>, precision = #tpu.contract_precision<fp32>} : vector<8x16xf32>, vector<16x128xf32>, vector<8x128xf32> -> vector<8x128xf32>
    %c0_3 = arith.constant 0 : index
    %c0_4 = arith.constant 0 : index
    %8 = vector.load %arg3[%c0_3, %c0_4] : memref<8x128xf32, #tpu.memory_space<vmem>>, vector<8x128xf32>
    tpu.vector_store %arg3[%c0_3, %c0_4], %7 {strides = array<i32>} : memref<8x128xf32, #tpu.memory_space<vmem>>, vector<8x128xf32>,
    return
  }
  func.func @transform_0(%arg0: i32) -> (i32, i32) {
    %c0_i32 = arith.constant 0 : i32
    %c0_i32_0 = arith.constant 0 : i32
    return %arg0, %c0_i32 : i32, i32
  }
  func.func @transform_1(%arg0: i32) -> (i32, i32) {
    %c0_i32 = arith.constant 0 : i32
    %c0_i32_0 = arith.constant 0 : i32
    %c0_i32_1 = arith.constant 0 : i32
    return %c0_i32, %c0_i32_0 : i32, i32
  }
  func.func @transform_2(%arg0: i32) -> (i32, i32) {
    %c0_i32 = arith.constant 0 : i32
    %c0_i32_0 = arith.constant 0 : i32
    return %arg0, %c0_i32 : i32, i32
  }
}

</mosaic_0001>

<llo_original>
// kernel: embedding_gather.1
$region0: #{embedding_gather.1}
  #allocation0 [shape = 'u32[]', space=smem, size = 0x4, offset = 0x4, fixed_abs, tag = 'smem constant byte address 0x4 - core index']
  #allocation1 [shape = 'u32[144,128]{1,0:T(1,128)}', space=vmem, size = 0x12000, scoped, tag = 'internal scratch']
  %s0 = inlined_call_operand.vmem [shape: s32[8,1], index: 0, kind: input, shape index: {}]
  %s1 = inlined_call_operand.vmem [shape: f32[16,128], index: 1, kind: input, shape index: {}]
  %s2 = inlined_call_operand.hbm [shape: f32[8,128], index: 2, kind: output, shape index: {}]
  %s3 = sld [smem:[#allocation0]]
  $region18: #{embedding_gather.1} parent=0
    _
  %s5 = ssub.s32 1, %s3
  %s6 = scalar_select 0, %s5, %s3
  $region1: #{embedding_gather.1} parent=0
    #allocation2 [shape = 'u8[4096]{0}', space=vmem, size = 0x1000, scoped, tag = 'output window, operand 0, single buffered']
    #allocation3 [shape = 's32[1]{0}', space=sflag, size = 0x4, scoped, tag = 'scoped memory for embedding_gather.1']
    %7 = vsyncpa [#allocation3], 0
    // Predicated region
    $region2: #{embedding_gather.1} parent=1 // pred_check
      _
    $region3: #{embedding_gather.1} parent=1 // pred_check_branch
      %9 = sbr.rel (0) target = $region5
    $region4: #{embedding_gather.1} parent=1 // pred_region
      _
    $region5: #{embedding_gather.1} parent=1 // pred_fallthru
      _
    // Predicated region
    $region6: #{embedding_gather.1} parent=1 // pred_check
      _
    $region7: #{embedding_gather.1} parent=1 // pred_check_branch
      %11 = sbr.rel (0) target = $region9
    $region8: #{embedding_gather.1} parent=1 // pred_region
      _
    $region9: #{embedding_gather.1} parent=1 // pred_fallthru
      _
    %v12 = vld [vmem:[%s0] sm:$0xff]
    %v13 = vlaneseq
    %v14 = vand.u32 %v13, 127
    %15 = vset.pattern.permute.xlu0 0
    %16 = vperm.xlu0 %15, %v12
    %v17 = vpop.permute.xlu0 %16
    %vm18 = vcmp.eq.s32.totalorder %v14, %v17
    %v19 = vsel %vm18, 1, 0
    %v20 = vcvt.s32.f32 %v19
    %v21 = vld [vmem:[%s1] sm:$0xff]
    %v22 = vld [vmem:[%s1 + $0x8] sm:$0xff]
    %vm23 = vcmask 130048
    %v25 = vsel %vm23, %v20, 0
    %27 = vmatprep.subr.mxu0 0.0
    %v28 = vand.u32 %v21, 4294901760
    %29 = vmatpush1.msra.mxu0 %v28
    %30 = vmatprep.subr.mxu0 0.0
    %v31 = vand.u32 %v22, 4294901760
    %32 = vmatpush1.msra.mxu0 %v31
    %33 = vmatprep.subr.mxu0 0.0
    %34 = vmatpush1.msra.mxu0 0.0
    %35 = vmatprep.subr.mxu0 0.0
    %36 = vmatpush1.msra.mxu0 0.0
    %37 = vmatprep.subr.mxu0 0.0
    %38 = vmatpush1.msra.mxu0 0.0
    %39 = vmatprep.subr.mxu0 0.0
    %40 = vmatpush1.msra.mxu0 0.0
    %41 = vmatprep.subr.mxu0 0.0
    %42 = vmatpush1.msra.mxu0 0.0
    %43 = vmatprep.subr.mxu0 0.0
    %44 = vmatpush1.msra.mxu0 0.0
    %45 = vmatprep.subr.mxu0 0.0
    %46 = vmatpush1.msra.mxu0 0.0
    %47 = vmatprep.subr.mxu0 0.0
    %48 = vmatpush1.msra.mxu0 0.0
    %49 = vmatprep.subr.mxu0 0.0
    %50 = vmatpush1.msra.mxu0 0.0
    %51 = vmatprep.subr.mxu0 0.0
    %52 = vmatpush1.msra.mxu0 0.0
    %53 = vmatprep.subr.mxu0 0.0
    %54 = vmatpush1.msra.mxu0 0.0
    %55 = vmatprep.subr.mxu0 0.0
    %56 = vmatpush1.msra.mxu0 0.0
    %57 = vmatprep.subr.mxu0 0.0
    %58 = vmatpush1.msra.mxu0 0.0
    %59 = vmatprep.subr.mxu0 0.0
    %60 = vmatpush1.msra.mxu0 0.0
    %61 = vmatprep.subr.mxu0 0.0
    %62 = vmatpush1.msra.mxu0 0.0
    %63 = vmatprep.subr.mxu0 0.0
    %64 = vmatpush1.msra.mxu0 0.0
    %65 = vmatprep.subr.mxu0 0.0
    %66 = vmatpush1.msra.mxu0 0.0
    %67 = vmatprep.subr.mxu0 0.0
    %68 = vmatpush1.msra.mxu0 0.0
    %69 = vmatprep.subr.mxu0 0.0
    %70 = vmatpush1.msra.mxu0 0.0
    %71 = vmatprep.subr.mxu0 0.0
    %72 = vmatpush1.msra.mxu0 0.0
    %73 = vmatprep.subr.mxu0 0.0
    %74 = vmatpush1.msra.mxu0 0.0
    %75 = vmatprep.subr.mxu0 0.0
    %76 = vmatpush1.msra.mxu0 0.0
    %77 = vmatprep.subr.mxu0 0.0
    %78 = vmatpush1.msra.mxu0 0.0
    %79 = vmatprep.subr.mxu0 0.0
    %80 = vmatpush1.msra.mxu0 0.0
    %81 = vmatprep.subr.mxu0 0.0
    %82 = vmatpush1.msra.mxu0 0.0
    %83 = vmatprep.subr.mxu0 0.0
    %84 = vmatpush1.msra.mxu0 0.0
    %85 = vmatprep.subr.mxu0 0.0
    %86 = vmatpush1.msra.mxu0 0.0
    %87 = vmatprep.subr.mxu0 0.0
    %88 = vmatpush1.msra.mxu0 0.0
    %89 = vmatprep.subr.mxu0 0.0
    %90 = vmatpush1.msra.mxu0 0.0
    %91 = vmatprep.subr.mxu0 0.0
    %92 = vmatpush1.msra.mxu0 0.0
    %93 = vmatprep.mubr.f32.mxu0 0.0
    %v94 = vand.u32 %v25, 4294901760
    %v95 = vsub.f32 %v25, %v94
    %v96 = vand.u32 %v95, 4294901760
    %v97 = vsub.f32 %v95, %v96
    %v98 = vand.u32 %v97, 4294901760
    %99 = vmatmul.mubr.f32.gmra.mrb[0].mxu0 %v98
    %v100 = vpop.f32.mrb[0].mxu0
    %v101 = vadd.f32 0.0, %v100
    %v102 = vpop.f32.mrb[0].mxu0
    %103 = vdwg.mxu0
    %104 = vmatprep.subr.mxu0 0.0
    %v105 = vand.u32 %v21, 4294901760
    %v106 = vsub.f32 %v21, %v105
    %v107 = vand.u32 %v106, 4294901760
    %v108 = vsub.f32 %v106, %v107
    %v109 = vand.u32 %v108, 4294901760
    %110 = vmatpush1.msra.mxu0 %v109
    %111 = vmatprep.subr.mxu0 0.0
    %v112 = vand.u32 %v22, 4294901760
    %v113 = vsub.f32 %v22, %v112
    %v114 = vand.u32 %v113, 4294901760
    %v115 = vsub.f32 %v113, %v114
    %v116 = vand.u32 %v115, 4294901760
    %117 = vmatpush1.msra.mxu0 %v116
    %118 = vmatprep.subr.mxu0 0.0
    %119 = vmatpush1.msra.mxu0 0.0
    %120 = vmatprep.subr.mxu0 0.0
    %121 = vmatpush1.msra.mxu0 0.0
    %122 = vmatprep.subr.mxu0 0.0
    %123 = vmatpush1.msra.mxu0 0.0
    %124 = vmatprep.subr.mxu0 0.0
    %125 = vmatpush1.msra.mxu0 0.0
    %126 = vmatprep.subr.mxu0 0.0
    %127 = vmatpush1.msra.mxu0 0.0
    %128 = vmatprep.subr.mxu0 0.0
    %129 = vmatpush1.msra.mxu0 0.0
    %130 = vmatprep.subr.mxu0 0.0
    %131 = vmatpush1.msra.mxu0 0.0
    %132 = vmatprep.subr.mxu0 0.0
    %133 = vmatpush1.msra.mxu0 0.0
    %134 = vmatprep.subr.mxu0 0.0
    %135 = vmatpush1.msra.mxu0 0.0
    %136 = vmatprep.subr.mxu0 0.0
    %137 = vmatpush1.msra.mxu0 0.0
    %138 = vmatprep.subr.mxu0 0.0
    %139 = vmatpush1.msra.mxu0 0.0
    %140 = vmatprep.subr.mxu0 0.0
    %141 = vmatpush1.msra.mxu0 0.0
    %142 = vmatprep.subr.mxu0 0.0
    %143 = vmatpush1.msra.mxu0 0.0
    %144 = vmatprep.subr.mxu0 0.0
    %145 = vmatpush1.msra.mxu0 0.0
    %146 = vmatprep.subr.mxu0 0.0
    %147 = vmatpush1.msra.mxu0 0.0
    %148 = vmatprep.subr.mxu0 0.0
    %149 = vmatpush1.msra.mxu0 0.0
    %150 = vmatprep.subr.mxu0 0.0
    %151 = vmatpush1.msra.mxu0 0.0
    %152 = vmatprep.subr.mxu0 0.0
    %153 = vmatpush1.msra.mxu0 0.0
    %154 = vmatprep.subr.mxu0 0.0
    %155 = vmatpush1.msra.mxu0 0.0
    %156 = vmatprep.subr.mxu0 0.0
    %157 = vmatpush1.msra.mxu0 0.0
    %158 = vmatprep.subr.mxu0 0.0
    %159 = vmatpush1.msra.mxu0 0.0
    %160 = vmatprep.subr.mxu0 0.0
    %161 = vmatpush1.msra.mxu0 0.0
    %162 = vmatprep.subr.mxu0 0.0
    %163 = vmatpush1.msra.mxu0 0.0
    %164 = vmatprep.subr.mxu0 0.0
    %165 = vmatpush1.msra.mxu0 0.0
    %166 = vmatprep.subr.mxu0 0.0
    %167 = vmatpush1.msra.mxu0 0.0
    %168 = vmatprep.subr.mxu0 0.0
    %169 = vmatpush1.msra.mxu0 0.0
    %170 = vmatprep.subr.mxu0 0.0
    %171 = vmatpush1.msra.mxu0 0.0
    %172 = vmatprep.subr.mxu0 0.0
    %173 = vmatpush1.msra.mxu0 0.0
    %174 = vmatprep.subr.mxu0 0.0
    %175 = vmatpush1.msra.mxu0 0.0
    %176 = vmatprep.subr.mxu0 0.0
    %177 = vmatpush1.msra.mxu0 0.0
    %178 = vmatprep.mubr.f32.mxu0 0.0
    %v179 = vand.u32 %v25, 4294901760
    %180 = vmatmul.mubr.f32.gmra.mrb[0].mxu0 %v179
    %v181 = vpop.f32.mrb[0].mxu0
    %v182 = vadd.f32 %v101, %v181
    %v183 = vpop.f32.mrb[0].mxu0
    %184 = vdwg.mxu0
    %185 = vmatprep.subr.mxu0 0.0
    %v186 = vand.u32 %v21, 4294901760
    %v187 = vsub.f32 %v21, %v186
    %188 = vmatpush1.msra.mxu0 %v187
    %189 = vmatprep.subr.mxu0 0.0
    %v190 = vand.u32 %v22, 4294901760
    %v191 = vsub.f32 %v22, %v190
    %192 = vmatpush1.msra.mxu0 %v191
    %193 = vmatprep.subr.mxu0 0.0
    %194 = vmatpush1.msra.mxu0 0.0
    %195 = vmatprep.subr.mxu0 0.0
    %196 = vmatpush1.msra.mxu0 0.0
    %197 = vmatprep.subr.mxu0 0.0
    %198 = vmatpush1.msra.mxu0 0.0
    %199 = vmatprep.subr.mxu0 0.0
    %200 = vmatpush1.msra.mxu0 0.0
    %201 = vmatprep.subr.mxu0 0.0
    %202 = vmatpush1.msra.mxu0 0.0
    %203 = vmatprep.subr.mxu0 0.0
    %204 = vmatpush1.msra.mxu0 0.0
    %205 = vmatprep.subr.mxu0 0.0
    %206 = vmatpush1.msra.mxu0 0.0
    %207 = vmatprep.subr.mxu0 0.0
    %208 = vmatpush1.msra.mxu0 0.0
    %209 = vmatprep.subr.mxu0 0.0
    %210 = vmatpush1.msra.mxu0 0.0
    %211 = vmatprep.subr.mxu0 0.0
    %212 = vmatpush1.msra.mxu0 0.0
    %213 = vmatprep.subr.mxu0 0.0
    %214 = vmatpush1.msra.mxu0 0.0
    %215 = vmatprep.subr.mxu0 0.0
    %216 = vmatpush1.msra.mxu0 0.0
    %217 = vmatprep.subr.mxu0 0.0
    %218 = vmatpush1.msra.mxu0 0.0
    %219 = vmatprep.subr.mxu0 0.0
    %220 = vmatpush1.msra.mxu0 0.0
    %221 = vmatprep.subr.mxu0 0.0
    %222 = vmatpush1.msra.mxu0 0.0
    %223 = vmatprep.subr.mxu0 0.0
    %224 = vmatpush1.msra.mxu0 0.0
    %225 = vmatprep.subr.mxu0 0.0
    %226 = vmatpush1.msra.mxu0 0.0
    %227 = vmatprep.subr.mxu0 0.0
    %228 = vmatpush1.msra.mxu0 0.0
    %229 = vmatprep.subr.mxu0 0.0
    %230 = vmatpush1.msra.mxu0 0.0
    %231 = vmatprep.subr.mxu0 0.0
    %232 = vmatpush1.msra.mxu0 0.0
    %233 = vmatprep.subr.mxu0 0.0
    %234 = vmatpush1.msra.mxu0 0.0
    %235 = vmatprep.subr.mxu0 0.0
    %236 = vmatpush1.msra.mxu0 0.0
    %237 = vmatprep.subr.mxu0 0.0
    %238 = vmatpush1.msra.mxu0 0.0
    %239 = vmatprep.subr.mxu0 0.0
    %240 = vmatpush1.msra.mxu0 0.0
    %241 = vmatprep.subr.mxu0 0.0
    %242 = vmatpush1.msra.mxu0 0.0
    %243 = vmatprep.subr.mxu0 0.0
    %244 = vmatpush1.msra.mxu0 0.0
    %245 = vmatprep.subr.mxu0 0.0
    %246 = vmatpush1.msra.mxu0 0.0
    %247 = vmatprep.subr.mxu0 0.0
    %248 = vmatpush1.msra.mxu0 0.0
    %249 = vmatprep.subr.mxu0 0.0
    %250 = vmatpush1.msra.mxu0 0.0
    %251 = vmatprep.subr.mxu0 0.0
    %252 = vmatpush1.msra.mxu0 0.0
    %253 = vmatprep.mubr.f32.mxu0 0.0
    %v254 = vand.u32 %v25, 4294901760
    %v255 = vsub.f32 %v25, %v254
    %256 = vmatmul.mubr.f32.gmra.mrb[0].mxu0 %v255
    %v257 = vpop.f32.mrb[0].mxu0
    %v258 = vadd.f32 %v182, %v257
    %v259 = vpop.f32.mrb[0].mxu0
    %260 = vdwg.mxu0
    %261 = vmatprep.subr.mxu0 0.0
    %v262 = vand.u32 %v21, 4294901760
    %263 = vmatpush1.msra.mxu0 %v262
    %264 = vmatprep.subr.mxu0 0.0
    %v265 = vand.u32 %v22, 4294901760
    %266 = vmatpush1.msra.mxu0 %v265
    %267 = vmatprep.subr.mxu0 0.0
    %268 = vmatpush1.msra.mxu0 0.0
    %269 = vmatprep.subr.mxu0 0.0
    %270 = vmatpush1.msra.mxu0 0.0
    %271 = vmatprep.subr.mxu0 0.0
    %272 = vmatpush1.msra.mxu0 0.0
    %273 = vmatprep.subr.mxu0 0.0
    %274 = vmatpush1.msra.mxu0 0.0
    %275 = vmatprep.subr.mxu0 0.0
    %276 = vmatpush1.msra.mxu0 0.0
    %277 = vmatprep.subr.mxu0 0.0
    %278 = vmatpush1.msra.mxu0 0.0
    %279 = vmatprep.subr.mxu0 0.0
    %280 = vmatpush1.msra.mxu0 0.0
    %281 = vmatprep.subr.mxu0 0.0
    %282 = vmatpush1.msra.mxu0 0.0
    %283 = vmatprep.subr.mxu0 0.0
    %284 = vmatpush1.msra.mxu0 0.0
    %285 = vmatprep.subr.mxu0 0.0
    %286 = vmatpush1.msra.mxu0 0.0
    %287 = vmatprep.subr.mxu0 0.0
    %288 = vmatpush1.msra.mxu0 0.0
    %289 = vmatprep.subr.mxu0 0.0
    %290 = vmatpush1.msra.mxu0 0.0
    %291 = vmatprep.subr.mxu0 0.0
    %292 = vmatpush1.msra.mxu0 0.0
    %293 = vmatprep.subr.mxu0 0.0
    %294 = vmatpush1.msra.mxu0 0.0
    %295 = vmatprep.subr.mxu0 0.0
    %296 = vmatpush1.msra.mxu0 0.0
    %297 = vmatprep.subr.mxu0 0.0
    %298 = vmatpush1.msra.mxu0 0.0
    %299 = vmatprep.subr.mxu0 0.0
    %300 = vmatpush1.msra.mxu0 0.0
    %301 = vmatprep.subr.mxu0 0.0
    %302 = vmatpush1.msra.mxu0 0.0
    %303 = vmatprep.subr.mxu0 0.0
    %304 = vmatpush1.msra.mxu0 0.0
    %305 = vmatprep.subr.mxu0 0.0
    %306 = vmatpush1.msra.mxu0 0.0
    %307 = vmatprep.subr.mxu0 0.0
    %308 = vmatpush1.msra.mxu0 0.0
    %309 = vmatprep.subr.mxu0 0.0
    %310 = vmatpush1.msra.mxu0 0.0
    %311 = vmatprep.subr.mxu0 0.0
    %312 = vmatpush1.msra.mxu0 0.0
    %313 = vmatprep.subr.mxu0 0.0
    %314 = vmatpush1.msra.mxu0 0.0
    %315 = vmatprep.subr.mxu0 0.0
    %316 = vmatpush1.msra.mxu0 0.0
    %317 = vmatprep.subr.mxu0 0.0
    %318 = vmatpush1.msra.mxu0 0.0
    %319 = vmatprep.subr.mxu0 0.0
    %320 = vmatpush1.msra.mxu0 0.0
    %321 = vmatprep.subr.mxu0 0.0
    %322 = vmatpush1.msra.mxu0 0.0
    %323 = vmatprep.subr.mxu0 0.0
    %324 = vmatpush1.msra.mxu0 0.0
    %325 = vmatprep.subr.mxu0 0.0
    %326 = vmatpush1.msra.mxu0 0.0
    %327 = vmatprep.mubr.f32.mxu0 0.0
    %v328 = vand.u32 %v25, 4294901760
    %v329 = vsub.f32 %v25, %v328
    %v330 = vand.u32 %v329, 4294901760
    %331 = vmatmul.mubr.f32.gmra.mrb[0].mxu0 %v330
    %v332 = vpop.f32.mrb[0].mxu0
    %v333 = vadd.f32 %v258, %v332
    %v334 = vpop.f32.mrb[0].mxu0
    %335 = vdwg.mxu0
    %336 = vmatprep.subr.mxu0 0.0
    %v337 = vand.u32 %v21, 4294901760
    %v338 = vsub.f32 %v21, %v337
    %v339 = vand.u32 %v338, 4294901760
    %340 = vmatpush1.msra.mxu0 %v339
    %341 = vmatprep.subr.mxu0 0.0
    %v342 = vand.u32 %v22, 4294901760
    %v343 = vsub.f32 %v22, %v342
    %v344 = vand.u32 %v343, 4294901760
    %345 = vmatpush1.msra.mxu0 %v344
    %346 = vmatprep.subr.mxu0 0.0
    %347 = vmatpush1.msra.mxu0 0.0
    %348 = vmatprep.subr.mxu0 0.0
    %349 = vmatpush1.msra.mxu0 0.0
    %350 = vmatprep.subr.mxu0 0.0
    %351 = vmatpush1.msra.mxu0 0.0
    %352 = vmatprep.subr.mxu0 0.0
    %353 = vmatpush1.msra.mxu0 0.0
    %354 = vmatprep.subr.mxu0 0.0
    %355 = vmatpush1.msra.mxu0 0.0
    %356 = vmatprep.subr.mxu0 0.0
    %357 = vmatpush1.msra.mxu0 0.0
    %358 = vmatprep.subr.mxu0 0.0
    %359 = vmatpush1.msra.mxu0 0.0
    %360 = vmatprep.subr.mxu0 0.0
    %361 = vmatpush1.msra.mxu0 0.0
    %362 = vmatprep.subr.mxu0 0.0
    %363 = vmatpush1.msra.mxu0 0.0
    %364 = vmatprep.subr.mxu0 0.0
    %365 = vmatpush1.msra.mxu0 0.0
    %366 = vmatprep.subr.mxu0 0.0
    %367 = vmatpush1.msra.mxu0 0.0
    %368 = vmatprep.subr.mxu0 0.0
    %369 = vmatpush1.msra.mxu0 0.0
    %370 = vmatprep.subr.mxu0 0.0
    %371 = vmatpush1.msra.mxu0 0.0
    %372 = vmatprep.subr.mxu0 0.0
    %373 = vmatpush1.msra.mxu0 0.0
    %374 = vmatprep.subr.mxu0 0.0
    %375 = vmatpush1.msra.mxu0 0.0
    %376 = vmatprep.subr.mxu0 0.0
    %377 = vmatpush1.msra.mxu0 0.0
    %378 = vmatprep.subr.mxu0 0.0
    %379 = vmatpush1.msra.mxu0 0.0
    %380 = vmatprep.subr.mxu0 0.0
    %381 = vmatpush1.msra.mxu0 0.0
    %382 = vmatprep.subr.mxu0 0.0
    %383 = vmatpush1.msra.mxu0 0.0
    %384 = vmatprep.subr.mxu0 0.0
    %385 = vmatpush1.msra.mxu0 0.0
    %386 = vmatprep.subr.mxu0 0.0
    %387 = vmatpush1.msra.mxu0 0.0
    %388 = vmatprep.subr.mxu0 0.0
    %389 = vmatpush1.msra.mxu0 0.0
    %390 = vmatprep.subr.mxu0 0.0
    %391 = vmatpush1.msra.mxu0 0.0
    %392 = vmatprep.subr.mxu0 0.0
    %393 = vmatpush1.msra.mxu0 0.0
    %394 = vmatprep.subr.mxu0 0.0
    %395 = vmatpush1.msra.mxu0 0.0
    %396 = vmatprep.subr.mxu0 0.0
    %397 = vmatpush1.msra.mxu0 0.0
    %398 = vmatprep.subr.mxu0 0.0
    %399 = vmatpush1.msra.mxu0 0.0
    %400 = vmatprep.subr.mxu0 0.0
    %401 = vmatpush1.msra.mxu0 0.0
    %402 = vmatprep.subr.mxu0 0.0
    %403 = vmatpush1.msra.mxu0 0.0
    %404 = vmatprep.subr.mxu0 0.0
    %405 = vmatpush1.msra.mxu0 0.0
    %406 = vmatprep.mubr.f32.mxu0 0.0
    %v407 = vand.u32 %v25, 4294901760
    %408 = vmatmul.mubr.f32.gmra.mrb[0].mxu0 %v407
    %v409 = vpop.f32.mrb[0].mxu0
    %v410 = vadd.f32 %v333, %v409
    %v411 = vpop.f32.mrb[0].mxu0
    %412 = vdwg.mxu0
    %413 = vmatprep.subr.mxu0 0.0
    %v414 = vand.u32 %v21, 4294901760
    %415 = vmatpush1.msra.mxu0 %v414
    %416 = vmatprep.subr.mxu0 0.0
    %v417 = vand.u32 %v22, 4294901760
    %418 = vmatpush1.msra.mxu0 %v417
    %419 = vmatprep.subr.mxu0 0.0
    %420 = vmatpush1.msra.mxu0 0.0
    %421 = vmatprep.subr.mxu0 0.0
    %422 = vmatpush1.msra.mxu0 0.0
    %423 = vmatprep.subr.mxu0 0.0
    %424 = vmatpush1.msra.mxu0 0.0
    %425 = vmatprep.subr.mxu0 0.0
    %426 = vmatpush1.msra.mxu0 0.0
    %427 = vmatprep.subr.mxu0 0.0
    %428 = vmatpush1.msra.mxu0 0.0
    %429 = vmatprep.subr.mxu0 0.0
    %430 = vmatpush1.msra.mxu0 0.0
    %431 = vmatprep.subr.mxu0 0.0
    %432 = vmatpush1.msra.mxu0 0.0
    %433 = vmatprep.subr.mxu0 0.0
    %434 = vmatpush1.msra.mxu0 0.0
    %435 = vmatprep.subr.mxu0 0.0
    %436 = vmatpush1.msra.mxu0 0.0
    %437 = vmatprep.subr.mxu0 0.0
    %438 = vmatpush1.msra.mxu0 0.0
    %439 = vmatprep.subr.mxu0 0.0
    %440 = vmatpush1.msra.mxu0 0.0
    %441 = vmatprep.subr.mxu0 0.0
    %442 = vmatpush1.msra.mxu0 0.0
    %443 = vmatprep.subr.mxu0 0.0
    %444 = vmatpush1.msra.mxu0 0.0
    %445 = vmatprep.subr.mxu0 0.0
    %446 = vmatpush1.msra.mxu0 0.0
    %447 = vmatprep.subr.mxu0 0.0
    %448 = vmatpush1.msra.mxu0 0.0
    %449 = vmatprep.subr.mxu0 0.0
    %450 = vmatpush1.msra.mxu0 0.0
    %451 = vmatprep.subr.mxu0 0.0
    %452 = vmatpush1.msra.mxu0 0.0
    %453 = vmatprep.subr.mxu0 0.0
    %454 = vmatpush1.msra.mxu0 0.0
    %455 = vmatprep.subr.mxu0 0.0
    %456 = vmatpush1.msra.mxu0 0.0
    %457 = vmatprep.subr.mxu0 0.0
    %458 = vmatpush1.msra.mxu0 0.0
    %459 = vmatprep.subr.mxu0 0.0
    %460 = vmatpush1.msra.mxu0 0.0
    %461 = vmatprep.subr.mxu0 0.0
    %462 = vmatpush1.msra.mxu0 0.0
    %463 = vmatprep.subr.mxu0 0.0
    %464 = vmatpush1.msra.mxu0 0.0
    %465 = vmatprep.subr.mxu0 0.0
    %466 = vmatpush1.msra.mxu0 0.0
    %467 = vmatprep.subr.mxu0 0.0
    %468 = vmatpush1.msra.mxu0 0.0
    %469 = vmatprep.subr.mxu0 0.0
    %470 = vmatpush1.msra.mxu0 0.0
    %471 = vmatprep.subr.mxu0 0.0
    %472 = vmatpush1.msra.mxu0 0.0
    %473 = vmatprep.subr.mxu0 0.0
    %474 = vmatpush1.msra.mxu0 0.0
    %475 = vmatprep.subr.mxu0 0.0
    %476 = vmatpush1.msra.mxu0 0.0
    %477 = vmatprep.subr.mxu0 0.0
    %478 = vmatpush1.msra.mxu0 0.0
    %479 = vmatprep.mubr.f32.mxu0 0.0
    %v480 = vand.u32 %v25, 4294901760
    %481 = vmatmul.mubr.f32.gmra.mrb[0].mxu0 %v480
    %v482 = vpop.f32.mrb[0].mxu0
    %v483 = vadd.f32 %v410, %v482
    %v484 = vpop.f32.mrb[0].mxu0
    %485 = vdwg.mxu0
    %486 = vst [vmem:[#allocation2] sm:$0xff] %v483
    // Predicated region
    $region10: #{embedding_gather.1} parent=1 // pred_check
      _
    $region11: #{embedding_gather.1} parent=1 // pred_check_branch
      %488 = sbr.rel (0) target = $region13
    $region12: #{embedding_gather.1} parent=1 // pred_region
      %s490 = ssub.s32 128, 128
      %491 = vsyncadd [#allocation3], %s490
      %s493 = sshll.u32 [#allocation2], 4
      %s494 = int_to_ptr.vmem [resolvable:$true] %s493
      %496 = dma.vmem_to_hbm [thread:$0]  %s494, 128, %s2, [#allocation3]
    $region13: #{embedding_gather.1} parent=1 // pred_fallthru
      _
    // Predicated region
    $region14: #{embedding_gather.1} parent=1 // pred_check
      _
    $region15: #{embedding_gather.1} parent=1 // pred_check_branch
      %498 = sbr.rel (0) target = $region17
    $region16: #{embedding_gather.1} parent=1 // pred_region
      %499 = dma.done [#allocation3], 128
    $region17: #{embedding_gather.1} parent=1 // pred_fallthru
      _
    %500 = vsyncpa [#allocation3], 1

</llo_original>
